<compile_context>
chip_gen: v7x
topology: tpu7x:2x2x1
jax: 0.10.0
libtpu: 0.0.40
codegen_flags: <defaults>
</compile_context>

<pallas_src>
import math

import jax
import jax.numpy as jnp
from jax import lax
from jax.experimental import pallas as pl
from jax.experimental.pallas import tpu as pltpu

D_MODEL = 32
MAX_LEN = 5000
P_DROP = 0.1
_DROP_THRESHOLD = int(round(P_DROP * (1 << 32)))   # drop if hash < threshold
_LANE = 128
_TARGET_BLOCK_BYTES = 1 << 20                      # ~1 MiB per pipelined buffer
_MAX_TRAIN_BATCH_TILE = 16                         # bounds static unroll in training mode


def make_positional_encoding_table(d_model: int, max_len: int = MAX_LEN) -> jnp.ndarray:
    """Deterministic buffer setup (plain-JAX glue, mirrors nn.Module __init__)."""
    position = jnp.arange(max_len, dtype=jnp.float32)[:, None]                   # (max_len, 1)
    div_term = jnp.exp(
        jnp.arange(0, d_model, 2, dtype=jnp.float32) * (-math.log(10000.0) / d_model)
    )                                                                            # (d_model/2,)
    pe = jnp.zeros((max_len, d_model), dtype=jnp.float32)
    pe = pe.at[:, 0::2].set(jnp.sin(position * div_term))
    pe = pe.at[:, 1::2].set(jnp.cos(position * div_term))
    return pe                                                                    # (max_len, d_model)


def _splitmix32(x):
    """Cheap stateless 32-bit mixer (plain VPU integer ops; lowers everywhere)."""
    x = x ^ (x >> jnp.uint32(16))
    x = x * jnp.uint32(0x7FEB352D)
    x = x ^ (x >> jnp.uint32(15))
    x = x * jnp.uint32(0x846CA68B)
    x = x ^ (x >> jnp.uint32(16))
    return x


def _factor_lane_layout(total: int):
    """Split S*D = R*C with C a multiple of 128 (lane axis) and R >= 8 when possible."""
    if total % _LANE != 0:
        return 1, total                              # fallback: full-extent lane dim
    c = _LANE
    while (total % (2 * c) == 0) and (total // (2 * c)) >= 8 and (2 * c) <= 2048:
        c *= 2
    return total // c, c


def _choose_tiles(batch: int, rows: int, cols: int, itemsize: int, training: bool):
    """Blocks ~<=1 MiB: full lane extent when possible, then rows, then batch."""
    if cols <= _LANE or cols * itemsize <= _TARGET_BLOCK_BYTES:
        c_tile = cols
    else:
        c_tile = max(_LANE, (_TARGET_BLOCK_BYTES // (itemsize * _LANE)) * _LANE)
    row_budget = max(1, _TARGET_BLOCK_BYTES // (c_tile * itemsize))
    if rows <= row_budget:
        r_tile = rows
        b_tile = max(1, min(batch, row_budget // max(rows, 1)))
    else:
        b_tile = 1
        r_tile = rows if rows <= 8 else min(rows, max(8, (row_budget // 8) * 8))
    if training:
        b_tile = min(b_tile, _MAX_TRAIN_BATCH_TILE)
    return b_tile, r_tile, c_tile


def _make_kernel(training: bool, b_tile: int, r_tile: int, c_tile: int, R: int, C: int):
    """Elementwise add of positional encoding + optional inverted dropout (p=0.1)."""
    scale = 1.0 / (1.0 - P_DROP)
    L = R * C

    def kernel(seed_ref, x_ref, pe_ref, o_ref):
        # x_ref/o_ref: (b_tile, r_tile, c_tile); pe_ref: (1, r_tile, c_tile).
        if not training:
            o_ref[...] = (x_ref[...] + pe_ref[...]).astype(o_ref.dtype)
            return

        pe = pe_ref[0]                                                  # (r_tile, c_tile)
        r0 = (pl.program_id(1) * r_tile).astype(jnp.uint32)
        c0 = (pl.program_id(2) * c_tile).astype(jnp.uint32)
        # Within-batch global flat position (2-D iotas only -> safe lowering).
        pos = (lax.broadcasted_iota(jnp.uint32, (r_tile, c_tile), 0) + r0) * jnp.uint32(C) \
            + lax.broadcasted_iota(jnp.uint32, (r_tile, c_tile), 1) + c0
        seed = seed_ref[0].astype(jnp.uint32) * jnp.uint32(0x9E3779B9)
        b_base = pl.program_id(0) * b_tile
        for b in range(b_tile):                                         # small static unroll
            gb = (b_base + b).astype(jnp.uint32)
            bits = _splitmix32(pos ^ (seed + gb * jnp.uint32(L)))
            keep = bits >= jnp.uint32(_DROP_THRESHOLD)
            o_ref[b] = ((x_ref[b] + pe) *
                        jnp.where(keep, jnp.float32(scale), jnp.float32(0.0))
                        ).astype(o_ref.dtype)

    return kernel


def positional_encoding_forward(x, pe_table, *, seed: int = 0, training: bool = True):
    """x: (seq_len, batch, d_model). Returns the same shape/dtype."""
    S, B, D = x.shape
    L = S * D
    R, C = _factor_lane_layout(L)

    # Lane/sublane-dense relayout (wrapper-side layout plumbing).
    x3 = jnp.transpose(x, (1, 0, 2)).reshape(B, R, C)                 # (B, R, C)
    pe3 = pe_table[:S, :].astype(x.dtype).reshape(1, R, C)            # (1, R, C), not replicated over B
    seed_arr = jnp.array([seed], dtype=jnp.int32)

    b_tile, r_tile, c_tile = _choose_tiles(B, R, C, x.dtype.itemsize, training)
    grid = (pl.cdiv(B, b_tile), pl.cdiv(R, r_tile), pl.cdiv(C, c_tile))

    out3 = pl.pallas_call(
        _make_kernel(training, b_tile, r_tile, c_tile, R, C),
        out_shape=jax.ShapeDtypeStruct((B, R, C), x.dtype),
        grid=grid,
        in_specs=[
            pl.BlockSpec(memory_space=pltpu.MemorySpace.SMEM),                 # seed scalar
            pl.BlockSpec((b_tile, r_tile, c_tile), lambda b, r, c: (b, r, c)),  # x
            pl.BlockSpec((1, r_tile, c_tile), lambda b, r, c: (0, r, c)),       # pe (bcast over B)
        ],
        out_specs=pl.BlockSpec((b_tile, r_tile, c_tile), lambda b, r, c: (b, r, c)),
        compiler_params=pltpu.CompilerParams(
            dimension_semantics=("parallel", "parallel", "parallel"),           # megacore-shardable
        ),
    )(seed_arr, x3, pe3)

    return out3.reshape(B, S, D).transpose(1, 0, 2)


if __name__ == "__main__":
    SEQ, BATCH = 8, 2
    key = jax.random.PRNGKey(0)
    x = jax.random.normal(key, (SEQ, BATCH, D_MODEL), dtype=jnp.float32)

    pe_table = make_positional_encoding_table(D_MODEL, MAX_LEN)
    ref = x + pe_table[:SEQ][:, None, :]

    # Eval mode (dropout = identity): exact match vs pure-JAX reference.
    out_eval = jax.block_until_ready(
        positional_encoding_forward(x, pe_table, training=False))
    assert out_eval.shape == x.shape and out_eval.dtype == x.dtype
    assert jnp.allclose(out_eval, ref, atol=1e-6), "eval-mode mismatch"

    # Training mode: inverted dropout p=0.1; every output is either 0 or ref/(1-p).
    out_train = jax.block_until_ready(
        positional_encoding_forward(x, pe_table, seed=123, training=True))
    assert out_train.shape == x.shape and out_train.dtype == x.dtype
    scaled = ref / (1.0 - P_DROP)
    ok = jnp.isclose(out_train, 0.0, atol=1e-6) | jnp.isclose(
        out_train, scaled, rtol=1e-5, atol=1e-6)
    assert bool(jnp.all(ok)), "training-mode values are not in {0, ref/(1-p)}"
    dropped = jnp.isclose(out_train, 0.0, atol=1e-6) & ~jnp.isclose(scaled, 0.0, atol=1e-6)
    frac = float(jnp.mean(dropped.astype(jnp.float32)))
    assert 0.0 < frac < 0.5, f"dropout fraction looks wrong: {frac}"

    # Determinism: same seed -> same mask.
    out_train2 = jax.block_until_ready(
        positional_encoding_forward(x, pe_table, seed=123, training=True))
    assert jnp.array_equal(out_train, out_train2)

    print("KERNEL_OK")
</pallas_src>

<mosaic_0001>
module attributes {stable_mosaic.version = 11 : i64} {
  func.func @kernel(%arg0: i32, %arg1: i32, %arg2: i32, %arg3: memref<1xi32, #tpu.memory_space<smem>>, %arg4: memref<2x2x128xf32, #tpu.memory_space<vmem>>, %arg5: memref<1x2x128xf32, #tpu.memory_space<vmem>>, %arg6: memref<2x2x128xf32, #tpu.memory_space<vmem>>) attributes {dimension_semantics = [#tpu.dimension_semantics<parallel>, #tpu.dimension_semantics<parallel>, #tpu.dimension_semantics<parallel>], iteration_bounds = array<i64: 1, 1, 1>, scalar_prefetch = 0 : i64, scratch_operands = 0 : i64, tpu.core_type = #tpu.core_type<tc>, window_params = [{transform_indices = @transform_0, window_bounds = array<i64: 1>}, {transform_indices = @transform_1, window_bounds = array<i64: 2, 2, 128>}, {transform_indices = @transform_2, window_bounds = array<i64: 1, 2, 128>}, {transform_indices = @transform_3, window_bounds = array<i64: 2, 2, 128>}]} {
    %c0 = arith.constant 0 : index
    %c0_0 = arith.constant 0 : index
    %c0_1 = arith.constant 0 : index
    %0 = vector.load %arg4[%c0, %c0_0, %c0_1] : memref<2x2x128xf32, #tpu.memory_space<vmem>>, vector<2x2x128xf32>
    %c0_2 = arith.constant 0 : index
    %c0_3 = arith.constant 0 : index
    %c0_4 = arith.constant 0 : index
    %1 = vector.load %arg5[%c0_2, %c0_3, %c0_4] : memref<1x2x128xf32, #tpu.memory_space<vmem>>, vector<1x2x128xf32>
    %2 = vector.broadcast %1 : vector<1x2x128xf32> to vector<2x2x128xf32>
    %3 = arith.addf %0, %2 : vector<2x2x128xf32>
    %c0_5 = arith.constant 0 : index
    %c0_6 = arith.constant 0 : index
    %c0_7 = arith.constant 0 : index
    %4 = vector.load %arg6[%c0_5, %c0_6, %c0_7] : memref<2x2x128xf32, #tpu.memory_space<vmem>>, vector<2x2x128xf32>
    tpu.vector_store %arg6[%c0_5, %c0_6, %c0_7], %3 {strides = array<i32>} : memref<2x2x128xf32, #tpu.memory_space<vmem>>, vector<2x2x128xf32>,
    return
  }
  func.func @transform_0(%arg0: i32, %arg1: i32, %arg2: i32) -> i32 {
    %c0_i32 = arith.constant 0 : i32
    %c0_i32_0 = arith.constant 0 : i32
    return %c0_i32 : i32
  }
  func.func @transform_1(%arg0: i32, %arg1: i32, %arg2: i32) -> (i32, i32, i32) {
    %c0_i32 = arith.constant 0 : i32
    return %arg0, %arg1, %arg2 : i32, i32, i32
  }
  func.func @transform_2(%arg0: i32, %arg1: i32, %arg2: i32) -> (i32, i32, i32) {
    %c0_i32 = arith.constant 0 : i32
    %c0_i32_0 = arith.constant 0 : i32
    return %c0_i32, %arg1, %arg2 : i32, i32, i32
  }
  func.func @transform_3(%arg0: i32, %arg1: i32, %arg2: i32) -> (i32, i32, i32) {
    %c0_i32 = arith.constant 0 : i32
    return %arg0, %arg1, %arg2 : i32, i32, i32
  }
}

</mosaic_0001>

<llo_original>
// kernel: tpu_custom_call.1
$region0: #{tpu_custom_call.1}
  #allocation0 [shape = 'u32[]', space=smem, size = 0x4, offset = 0x4, fixed_abs, tag = 'smem constant byte address 0x4 - core index']
  #allocation1 [shape = 'u32[144,128]{1,0:T(1,128)}', space=vmem, size = 0x12000, scoped, tag = 'internal scratch']
  #allocation2 [shape = 's32[1]{0:T(128)S(6)}', space=smem, size = 0x200, scoped, tag = 'scoped memory for tpu_custom_call.1']
  %s0 = inlined_call_operand.<no memory space> [shape: s32[1], index: 0, kind: input, shape index: {}]
  %s1 = inlined_call_operand.hbm [shape: f32[2,2,128], index: 1, kind: input, shape index: {}]
  %s2 = inlined_call_operand.vmem [shape: f32[1,2,128], index: 2, kind: input, shape index: {}]
  %s3 = inlined_call_operand.hbm [shape: f32[2,2,128], index: 3, kind: output, shape index: {}]
  %s4 = sld [smem:[#allocation0]]
  $region26: #{tpu_custom_call.1} parent=0
    _
  %s6 = ssub.s32 1, %s4
  %s7 = scalar_select 0, %s6, %s4
  %8 = sst [smem:[#allocation2]] %s0
  $region1: #{tpu_custom_call.1} parent=0
    #allocation3 [shape = 'u8[2048]{0}', space=vmem, size = 0x800, scoped, tag = 'input window, operand 1, single buffered']
    #allocation4 [shape = 's32[1]{0}', space=sflag, size = 0x4, scoped, tag = 'scoped memory for tpu_custom_call.1']
    #allocation5 [shape = 's32[1]{0}', space=sflag, size = 0x4, scoped, tag = 'scoped memory for tpu_custom_call.1']
    #allocation6 [shape = 'u8[2048]{0}', space=vmem, size = 0x800, scoped, tag = 'output window, operand 0, single buffered']
    %9 = vsyncpa [#allocation4], 0
    %10 = vsyncpa [#allocation5], 0
    // Predicated region
    $region2: #{tpu_custom_call.1} parent=1 // pred_check
      _
    $region3: #{tpu_custom_call.1} parent=1 // pred_check_branch
      %12 = sbr.rel (0) target = $region5
    $region4: #{tpu_custom_call.1} parent=1 // pred_region
      _
    $region5: #{tpu_custom_call.1} parent=1 // pred_fallthru
      _
    // Predicated region
    $region6: #{tpu_custom_call.1} parent=1 // pred_check
      _
    $region7: #{tpu_custom_call.1} parent=1 // pred_check_branch
      %14 = sbr.rel (0) target = $region9
    $region8: #{tpu_custom_call.1} parent=1 // pred_region
      %s16 = ssub.s32 64, 64
      %17 = vsyncadd [#allocation4], %s16
      %s18 = sshll.u32 [#allocation3], 4
      %s19 = int_to_ptr.vmem [resolvable:$true] %s18
      %24 = dma.hbm_to_vmem [thread:$0]  %s1, 64, %s19, [#allocation4], 32, 32, 2
    $region9: #{tpu_custom_call.1} parent=1 // pred_fallthru
      _
    // Predicated region
    $region10: #{tpu_custom_call.1} parent=1 // pred_check
      _
    $region11: #{tpu_custom_call.1} parent=1 // pred_check_branch
      %26 = sbr.rel (0) target = $region13
    $region12: #{tpu_custom_call.1} parent=1 // pred_region
      _
    $region13: #{tpu_custom_call.1} parent=1 // pred_fallthru
      _
    // Predicated region
    $region14: #{tpu_custom_call.1} parent=1 // pred_check
      _
    $region15: #{tpu_custom_call.1} parent=1 // pred_check_branch
      %28 = sbr.rel (0) target = $region17
    $region16: #{tpu_custom_call.1} parent=1 // pred_region
      %29 = dma.done [#allocation4], 64
    $region17: #{tpu_custom_call.1} parent=1 // pred_fallthru
      _
    %v30 = vld [vmem:[#allocation3] sm:$0x3]
    %v31 = vld [vmem:[#allocation3 + $0x2] sm:$0x3]
    %v32 = vld [vmem:[%s2] sm:$0x3]
    %v33 = vadd.f32 %v30, %v32
    %v34 = vadd.f32 %v31, %v32
    %35 = vst [vmem:[#allocation6] sm:$0x3] %v33
    %36 = vst [vmem:[#allocation6 + $0x2] sm:$0x3] %v34
    // Predicated region
    $region18: #{tpu_custom_call.1} parent=1 // pred_check
      _
    $region19: #{tpu_custom_call.1} parent=1 // pred_check_branch
      %38 = sbr.rel (0) target = $region21
    $region20: #{tpu_custom_call.1} parent=1 // pred_region
      %s40 = ssub.s32 64, 64
      %41 = vsyncadd [#allocation5], %s40
      %s42 = sshll.u32 [#allocation6], 4
      %s43 = int_to_ptr.vmem [resolvable:$true] %s42
      %48 = dma.vmem_to_hbm [thread:$0]  %s43, 64, %s3, [#allocation5], 32, 32, 2
    $region21: #{tpu_custom_call.1} parent=1 // pred_fallthru
      _
    // Predicated region
    $region22: #{tpu_custom_call.1} parent=1 // pred_check
      _
    $region23: #{tpu_custom_call.1} parent=1 // pred_check_branch
      %50 = sbr.rel (0) target = $region25
    $region24: #{tpu_custom_call.1} parent=1 // pred_region
      %51 = dma.done [#allocation5], 64
    $region25: #{tpu_custom_call.1} parent=1 // pred_fallthru
      _
    %52 = vsyncpa [#allocation4], 1
    %53 = vsyncpa [#allocation5], 1

</llo_original>
